<compile_context>
chip_gen: v5e
topology: v5e:2x2
jax: 0.10.0
libtpu: 0.0.40
codegen_flags: <defaults>
</compile_context>

<pallas_src>
import jax
import jax.numpy as jnp
from jax.experimental import pallas as pl
from jax.experimental.pallas import tpu as pltpu

LANES = 128                       # lane width: pad the class dim to a full vreg row
VMEM_TILE_BUDGET = 8 * 1024 * 1024   # per-buffer embedding-tile budget (x2 double buffer)


def _pick_block(n, cap, multiple=1):
    """Largest divisor of n that is <= cap and a multiple of `multiple`;
    falls back to the full extent n (always a legal TPU block)."""
    if n <= cap:
        return n
    d = (cap // multiple) * multiple
    while d >= multiple:
        if n % d == 0:
            return d
        d -= multiple
    return n


def wordavg_kernel(emb_ref, w_ref, b_ref, out_ref, acc_ref):
    # emb_ref: (S_blk, B_blk, D) bf16 tile of embedded tokens (seq-major, no transpose)
    # w_ref:   (D, C_pad) f32 fc weight, transposed, zero-padded, 1/S pre-folded
    # b_ref:   (1, C_pad) f32 fc bias, zero-padded
    # out_ref: (B_blk, C_pad) f32 padded logits (lane-dense store)
    # acc_ref: (B_blk, D) f32 running sum over the sequence axis (VMEM scratch)
    s_idx = pl.program_id(1)

    @pl.when(s_idx == 0)
    def _init():
        acc_ref[...] = jnp.zeros_like(acc_ref)

    # Sum this sequence tile; widen bf16 -> f32 only when feeding the accumulator.
    acc_ref[...] += jnp.sum(emb_ref[...].astype(jnp.float32), axis=0)

    @pl.when(s_idx == pl.num_programs(1) - 1)
    def _finalize():
        # 1/S is already folded into w_ref, so this is just sum @ (W^T/S) + b.
        logits = jnp.dot(acc_ref[...], w_ref[...],
                         preferred_element_type=jnp.float32)     # MXU, 128 dense cols
        out_ref[...] = logits + b_ref[...]


def word_avg_forward(x_ids, embedding, fc_w, fc_b, *, compute_dtype=jnp.bfloat16):
    """x_ids: (seq_len, batch) int32; embedding: (V, D) f32; fc_w: (C, D); fc_b: (C,)."""
    S, B = x_ids.shape
    V, D = embedding.shape
    C = fc_w.shape[0]
    itemsize = jnp.dtype(compute_dtype).itemsize

    # Embedding gather stays in XLA (index glue).  Output is seq-major (S, B, D):
    # the permute(1,0,2) of the PyTorch forward is absorbed into the kernel's
    # axis-0 reduction, so no full HBM transpose pass is paid.
    emb = jnp.take(embedding.astype(compute_dtype), x_ids, axis=0)        # (S, B, D)

    # Lane-dense classifier: pad C -> multiple of 128 and fold the 1/S mean scale
    # into the transposed weight once.
    c_pad = pl.cdiv(C, LANES) * LANES
    w_t = jnp.zeros((D, c_pad), jnp.float32).at[:, :C].set(
        fc_w.T.astype(jnp.float32) / S)
    bias = jnp.zeros((1, c_pad), jnp.float32).at[:, :C].set(fc_b.astype(jnp.float32))

    # Tile sizes: batch tiles on the parallel leading grid axis, seq tiles on the
    # trailing reduction axis.  Keep the double-buffered embedding tile within a
    # conservative budget so the same config fits v7x (64 MiB physical VMEM) as
    # well as v5e/v6e (128 MiB).
    b_blk = _pick_block(B, 64, multiple=8)
    s_cap = max(1, VMEM_TILE_BUDGET // (2 * b_blk * D * itemsize))
    s_blk = _pick_block(S, s_cap)
    grid = (B // b_blk, S // s_blk)

    out_padded = pl.pallas_call(
        wordavg_kernel,
        out_shape=jax.ShapeDtypeStruct((B, c_pad), jnp.float32),
        grid_spec=pltpu.PrefetchScalarGridSpec(
            num_scalar_prefetch=0,
            grid=grid,
            in_specs=[
                # (S_blk, B_blk, D) tile of the seq-major embedded tensor.
                pl.BlockSpec((s_blk, b_blk, D), lambda i, j: (j, i, 0)),
                # Small constant operands: constant index_map -> fetched once,
                # stay resident in VMEM across the grid.
                pl.BlockSpec((D, c_pad), lambda i, j: (0, 0)),
                pl.BlockSpec((1, c_pad), lambda i, j: (0, 0)),
            ],
            # Same output block across the seq axis -> accumulator-style output,
            # written only in the finalize branch.
            out_specs=pl.BlockSpec((b_blk, c_pad), lambda i, j: (i, 0)),
            scratch_shapes=[pltpu.VMEM((b_blk, D), jnp.float32)],
        ),
        compiler_params=pltpu.CompilerParams(
            # Batch tiles are independent (megacore-shardable on v7x); seq is the
            # sequential reduction axis and must stay "arbitrary".
            dimension_semantics=("parallel", "arbitrary"),
            vmem_limit_bytes=48 * 1024 * 1024,
        ),
        cost_estimate=pl.CostEstimate(
            flops=B * S * D + 2 * B * D * c_pad,
            transcendentals=0,
            bytes_accessed=S * B * D * itemsize + (D + 1 + B) * c_pad * 4,
        ),
    )(emb, w_t, bias)

    return out_padded[:, :C]


if __name__ == "__main__":
    # Small shapes consistent with the module's forward
    vocab_size = 50
    embed_dim = 32
    num_class = 4
    seq_len = 8
    batch = 2

    key = jax.random.PRNGKey(0)
    k_emb, k_w, k_b, k_ids = jax.random.split(key, 4)

    embedding = jax.random.normal(k_emb, (vocab_size, embed_dim), jnp.float32)
    fc_w = jax.random.normal(k_w, (num_class, embed_dim), jnp.float32) * 0.1
    fc_b = jax.random.normal(k_b, (num_class,), jnp.float32) * 0.1

    # Input token ids, (seq_len, batch) as the PyTorch forward implies
    x_ids = jax.random.randint(k_ids, (seq_len, batch), 0, vocab_size, jnp.int32)

    logits = jax.block_until_ready(word_avg_forward(x_ids, embedding, fc_w, fc_b))

    # Pure-JAX reference with matching compute precision (bf16 table, f32 math)
    emb_ref = jnp.take(embedding.astype(jnp.bfloat16), x_ids, axis=0).astype(jnp.float32)
    pooled_ref = jnp.mean(emb_ref, axis=0)          # == permute(1,0,2) + avg_pool2d
    ref = pooled_ref @ fc_w.T + fc_b

    assert logits.shape == (batch, num_class)
    err = jnp.max(jnp.abs(logits - ref))
    assert jnp.allclose(logits, ref, atol=2e-5, rtol=2e-5), f"max abs err {err}"
    print("KERNEL_OK")
</pallas_src>

<mosaic_0001>
module attributes {stable_mosaic.version = 11 : i64} {
  func.func @wordavg_kernel(%arg0: i32, %arg1: i32, %arg2: memref<8x2x32xbf16, #tpu.memory_space<vmem>>, %arg3: memref<32x128xf32, #tpu.memory_space<vmem>>, %arg4: memref<1x128xf32, #tpu.memory_space<vmem>>, %arg5: memref<2x128xf32, #tpu.memory_space<vmem>>, %arg6: memref<2x32xf32, #tpu.memory_space<vmem>>) attributes {dimension_semantics = [#tpu.dimension_semantics<parallel>, #tpu.dimension_semantics<arbitrary>], iteration_bounds = array<i64: 1, 1>, scalar_prefetch = 0 : i64, scratch_operands = 1 : i64, tpu.core_type = #tpu.core_type<tc>, window_params = [{transform_indices = @transform_0, window_bounds = array<i64: 8, 2, 32>}, {pipeline_mode = #tpu.pipeline_mode<synchronous>, transform_indices = @transform_1, window_bounds = array<i64: 32, 128>}, {pipeline_mode = #tpu.pipeline_mode<synchronous>, transform_indices = @transform_2, window_bounds = array<i64: 1, 128>}, {transform_indices = @transform_3, window_bounds = array<i64: 2, 128>}]} {
    %c0_i32 = arith.constant 0 : i32
    %0 = arith.cmpi eq, %arg1, %c0_i32 : i32
    %1 = arith.extui %0 : i1 to i32
    %c0_i32_0 = arith.constant 0 : i32
    %2 = arith.cmpi ne, %1, %c0_i32_0 : i32
    scf.if %2 {
      %cst_9 = arith.constant 0.000000e+00 : f32
      %12 = vector.broadcast %cst_9 : f32 to vector<2x32xf32>
      %c0_10 = arith.constant 0 : index
      %c0_11 = arith.constant 0 : index
      %13 = vector.load %arg6[%c0_10, %c0_11] : memref<2x32xf32, #tpu.memory_space<vmem>>, vector<2x32xf32>
      tpu.vector_store %arg6[%c0_10, %c0_11], %12 {strides = array<i32>} : memref<2x32xf32, #tpu.memory_space<vmem>>, vector<2x32xf32>,
    } else {
    }
    %c0 = arith.constant 0 : index
    %c0_1 = arith.constant 0 : index
    %3 = vector.load %arg6[%c0, %c0_1] : memref<2x32xf32, #tpu.memory_space<vmem>>, vector<2x32xf32>
    %c0_2 = arith.constant 0 : index
    %c0_3 = arith.constant 0 : index
    %c0_4 = arith.constant 0 : index
    %4 = vector.load %arg2[%c0_2, %c0_3, %c0_4] : memref<8x2x32xbf16, #tpu.memory_space<vmem>>, vector<8x2x32xbf16>
    %5 = arith.extf %4 : vector<8x2x32xbf16> to vector<8x2x32xf32>
    %cst = arith.constant dense<0.000000e+00> : vector<2x32xf32>
    %6 = vector.multi_reduction <add>, %5, %cst [0] : vector<8x2x32xf32> to vector<2x32xf32>
    %7 = arith.addf %3, %6 : vector<2x32xf32>
    %c0_5 = arith.constant 0 : index
    %c0_6 = arith.constant 0 : index
    %8 = vector.load %arg6[%c0_5, %c0_6] : memref<2x32xf32, #tpu.memory_space<vmem>>, vector<2x32xf32>
    tpu.vector_store %arg6[%c0_5, %c0_6], %7 {strides = array<i32>} : memref<2x32xf32, #tpu.memory_space<vmem>>, vector<2x32xf32>,
    %c0_i32_7 = arith.constant 0 : i32
    %9 = arith.cmpi eq, %arg1, %c0_i32_7 : i32
    %10 = arith.extui %9 : i1 to i32
    %c0_i32_8 = arith.constant 0 : i32
    %11 = arith.cmpi ne, %10, %c0_i32_8 : i32
    scf.if %11 {
      %c0_9 = arith.constant 0 : index
      %c0_10 = arith.constant 0 : index
      %12 = vector.load %arg6[%c0_9, %c0_10] : memref<2x32xf32, #tpu.memory_space<vmem>>, vector<2x32xf32>
      %c0_11 = arith.constant 0 : index
      %c0_12 = arith.constant 0 : index
      %13 = vector.load %arg3[%c0_11, %c0_12] : memref<32x128xf32, #tpu.memory_space<vmem>>, vector<32x128xf32>
      %cst_13 = arith.constant dense<0.000000e+00> : vector<2x128xf32>
      %14 = tpu.matmul %12, %13, %cst_13 {dimension_numbers = #tpu.dot_dimension_numbers<[1], [0], [0], [1], [0, 0, 1, 1], [], []>} : vector<2x32xf32>, vector<32x128xf32>, vector<2x128xf32> -> vector<2x128xf32>
      %c0_14 = arith.constant 0 : index
      %c0_15 = arith.constant 0 : index
      %15 = vector.load %arg4[%c0_14, %c0_15] : memref<1x128xf32, #tpu.memory_space<vmem>>, vector<1x128xf32>
      %16 = vector.broadcast %15 : vector<1x128xf32> to vector<2x128xf32>
      %17 = arith.addf %14, %16 : vector<2x128xf32>
      %c0_16 = arith.constant 0 : index
      %c0_17 = arith.constant 0 : index
      %18 = vector.load %arg5[%c0_16, %c0_17] : memref<2x128xf32, #tpu.memory_space<vmem>>, vector<2x128xf32>
      tpu.vector_store %arg5[%c0_16, %c0_17], %17 {strides = array<i32>} : memref<2x128xf32, #tpu.memory_space<vmem>>, vector<2x128xf32>,
    } else {
    }
    return
  }
  func.func @transform_0(%arg0: i32, %arg1: i32) -> (i32, i32, i32) {
    %c0_i32 = arith.constant 0 : i32
    %c0_i32_0 = arith.constant 0 : i32
    return %arg1, %arg0, %c0_i32 : i32, i32, i32
  }
  func.func @transform_1(%arg0: i32, %arg1: i32) -> (i32, i32) {
    %c0_i32 = arith.constant 0 : i32
    %c0_i32_0 = arith.constant 0 : i32
    %c0_i32_1 = arith.constant 0 : i32
    return %c0_i32, %c0_i32_0 : i32, i32
  }
  func.func @transform_2(%arg0: i32, %arg1: i32) -> (i32, i32) {
    %c0_i32 = arith.constant 0 : i32
    %c0_i32_0 = arith.constant 0 : i32
    %c0_i32_1 = arith.constant 0 : i32
    return %c0_i32, %c0_i32_0 : i32, i32
  }
  func.func @transform_3(%arg0: i32, %arg1: i32) -> (i32, i32) {
    %c0_i32 = arith.constant 0 : i32
    %c0_i32_0 = arith.constant 0 : i32
    return %arg0, %c0_i32 : i32, i32
  }
}

</mosaic_0001>

<llo_original>
// kernel: tpu_custom_call.1
$region0: #{tpu_custom_call.1}
  #allocation0 [shape = 'u32[]', space=smem, size = 0x4, offset = 0x4, fixed_abs, tag = 'smem constant byte address 0x4 - core index']
  #allocation1 [shape = 'u32[72,128]{1,0:T(1,128)}', space=vmem, size = 0x9000, scoped, tag = 'internal scratch']
  #allocation2 [shape = 'f32[2,32]{1,0:T(2,128)}', space=vmem, size = 0x400, scoped, tag = 'scratch operand']
  %s0 = inlined_call_operand.hbm [shape: bf16[8,2,32], index: 0, kind: input, shape index: {}]
  %s1 = inlined_call_operand.hbm [shape: f32[32,128], index: 1, kind: input, shape index: {}]
  %s2 = inlined_call_operand.vmem [shape: f32[1,128], index: 2, kind: input, shape index: {}]
  %s3 = inlined_call_operand.hbm [shape: f32[2,128], index: 3, kind: output, shape index: {}]
  %s4 = sld [smem:[#allocation0]]
  $region38: #{tpu_custom_call.1} parent=0
    _
  %s6 = ssub.s32 1, %s4
  %s7 = scalar_select 0, %s6, %s4
  $region1: #{tpu_custom_call.1} parent=0
    #allocation3 [shape = 'u8[4096]{0}', space=vmem, size = 0x1000, scoped, tag = 'input window, operand 0, single buffered']
    #allocation4 [shape = 's32[1]{0}', space=sflag, size = 0x4, scoped, tag = 'scoped memory for tpu_custom_call.1']
    #allocation5 [shape = 's32[1]{0}', space=sflag, size = 0x4, scoped, tag = 'scoped memory for tpu_custom_call.1']
    #allocation6 [shape = 'u8[16384]{0}', space=vmem, size = 0x4000, scoped, tag = 'input window, operand 1, single buffered']
    #allocation7 [shape = 's32[1]{0}', space=sflag, size = 0x4, scoped, tag = 'scoped memory for tpu_custom_call.1']
    #allocation8 [shape = 'u8[1024]{0}', space=vmem, size = 0x400, scoped, tag = 'output window, operand 0, single buffered']
    %8 = vsyncpa [#allocation4], 0
    %9 = vsyncpa [#allocation7], 0
    %10 = vsyncpa [#allocation5], 0
    // Predicated region
    $region2: #{tpu_custom_call.1} parent=1 // pred_check
      _
    $region3: #{tpu_custom_call.1} parent=1 // pred_check_branch
      %12 = sbr.rel (0) target = $region5
    $region4: #{tpu_custom_call.1} parent=1 // pred_region
      %14 = vsyncadd [#allocation4], 0
      %s15 = sshll.u32 %s0, 4
      %s16 = int_to_ptr.hbm [resolvable:$true] %s15
      %s17 = sshll.u32 [#allocation3], 4
      %s18 = int_to_ptr.vmem [resolvable:$true] %s17
      %23 = dma.hbm_to_vmem [thread:$0]  %s16, 128, %s18, [#allocation4], 16, 16, 1
    $region5: #{tpu_custom_call.1} parent=1 // pred_fallthru
      _
    // Predicated region
    $region6: #{tpu_custom_call.1} parent=1 // pred_check
      _
    $region7: #{tpu_custom_call.1} parent=1 // pred_check_branch
      %25 = sbr.rel (0) target = $region9
    $region8: #{tpu_custom_call.1} parent=1 // pred_region
      %27 = vsyncadd [#allocation7], 0
      %s28 = sshll.u32 %s1, 4
      %s29 = int_to_ptr.hbm [resolvable:$true] %s28
      %s30 = sshll.u32 [#allocation6], 4
      %s31 = int_to_ptr.vmem [resolvable:$true] %s30
      %36 = dma.hbm_to_vmem [thread:$0]  %s29, 512, %s31, [#allocation7], 128, 128, 8
    $region9: #{tpu_custom_call.1} parent=1 // pred_fallthru
      _
    // Predicated region
    $region10: #{tpu_custom_call.1} parent=1 // pred_check
      _
    $region11: #{tpu_custom_call.1} parent=1 // pred_check_branch
      %38 = sbr.rel (0) target = $region13
    $region12: #{tpu_custom_call.1} parent=1 // pred_region
      _
    $region13: #{tpu_custom_call.1} parent=1 // pred_fallthru
      _
    // Predicated region
    $region14: #{tpu_custom_call.1} parent=1 // pred_check
      _
    $region15: #{tpu_custom_call.1} parent=1 // pred_check_branch
      %40 = sbr.rel (0) target = $region17
    $region16: #{tpu_custom_call.1} parent=1 // pred_region
      %42 = dma.done [#allocation4], 128
    $region17: #{tpu_custom_call.1} parent=1 // pred_fallthru
      _
    // Predicated region
    $region18: #{tpu_custom_call.1} parent=1 // pred_check
      _
    $region19: #{tpu_custom_call.1} parent=1 // pred_check_branch
      %44 = sbr.rel (0) target = $region21
    $region20: #{tpu_custom_call.1} parent=1 // pred_region
      %46 = dma.done [#allocation7], 512
    $region21: #{tpu_custom_call.1} parent=1 // pred_fallthru
      _
    %p47 = scmp.eq.s32.totalorder 0, 0
    // Predicated region
    $region22: #{tpu_custom_call.1} parent=1 // pred_check
      %p48 = pneg %p47
    $region23: #{tpu_custom_call.1} parent=1 // pred_check_branch
      %50 = sbr.rel (%p48) target = $region25
    $region24: #{tpu_custom_call.1} parent=1 // pred_region
      %vm51 = vcmask 254976
      %52 = vst.msk [vmem:[#allocation2] sm:$0x3] %vm51, 0.0
    $region25: #{tpu_custom_call.1} parent=1 // pred_fallthru
      _
    %v53 = vld [vmem:[#allocation2] sm:$0x3]
    %v54 = vld [vmem:[#allocation3] sm:$0x1]
    %v55 = vld [vmem:[#allocation3 + $0x1] sm:$0x1]
    %v56 = vld [vmem:[#allocation3 + $0x2] sm:$0x1]
    %v57 = vld [vmem:[#allocation3 + $0x3] sm:$0x1]
    %v58 = vld [vmem:[#allocation3 + $0x4] sm:$0x1]
    %v59 = vld [vmem:[#allocation3 + $0x5] sm:$0x1]
    %v60 = vld [vmem:[#allocation3 + $0x6] sm:$0x1]
    %v61 = vld [vmem:[#allocation3 + $0x7] sm:$0x1]
    %v62 = vunpack.c.l.bf16 %v54
    %v63 = vunpack.c.l.bf16 %v55
    %v64 = vunpack.c.l.bf16 %v56
    %v65 = vunpack.c.l.bf16 %v57
    %v66 = vunpack.c.l.bf16 %v58
    %v67 = vunpack.c.l.bf16 %v59
    %v68 = vunpack.c.l.bf16 %v60
    %v69 = vunpack.c.l.bf16 %v61
    %vm70 = vcmask 254976
    %v71 = vsel %vm70, %v62, 0.0
    %v72 = vsel %vm70, %v63, 0.0
    %v73 = vadd.f32 %v71, %v72
    %v74 = vsel %vm70, %v64, 0.0
    %v75 = vadd.f32 %v73, %v74
    %v76 = vsel %vm70, %v65, 0.0
    %v77 = vadd.f32 %v75, %v76
    %v78 = vsel %vm70, %v66, 0.0
    %v79 = vadd.f32 %v77, %v78
    %v80 = vsel %vm70, %v67, 0.0
    %v81 = vadd.f32 %v79, %v80
    %v82 = vsel %vm70, %v68, 0.0
    %v83 = vadd.f32 %v81, %v82
    %v84 = vsel %vm70, %v69, 0.0
    %v85 = vadd.f32 %v83, %v84
    %v86 = vadd.f32 %v53, %v85
    %87 = vst.msk [vmem:[#allocation2] sm:$0x3] %vm70, %v86
    // Predicated region
    $region26: #{tpu_custom_call.1} parent=1 // pred_check
      %p88 = pneg %p47
    $region27: #{tpu_custom_call.1} parent=1 // pred_check_branch
      %90 = sbr.rel (%p88) target = $region29
    $region28: #{tpu_custom_call.1} parent=1 // pred_region
      %v91 = vld [vmem:[#allocation2] sm:$0x3]
      %v92 = vld [vmem:[#allocation6] sm:$0xff]
      %v93 = vld [vmem:[#allocation6 + $0x8] sm:$0xff]
      %v94 = vld [vmem:[#allocation6 + $0x10] sm:$0xff]
      %v95 = vld [vmem:[#allocation6 + $0x18] sm:$0xff]
      %v96 = vld [vmem:[%s2] sm:$0x1]
      %v98 = vperm.slane %v96, 0
      %vm100 = vcmask 261120
      %v102 = vsel %vm100, %v91, 0
      %104 = vmatpush.msra.mxu0 0.0
      %105 = vmatpush.msra.mxu0 0.0
      %106 = vmatpush.msra.mxu0 0.0
      %107 = vmatpush.msra.mxu0 0.0
      %108 = vmatpush.msra.mxu0 0.0
      %109 = vmatpush.msra.mxu0 0.0
      %110 = vmatpush.msra.mxu0 0.0
      %111 = vmatpush.msra.mxu0 0.0
      %112 = vmatpush.msra.mxu0 0.0
      %113 = vmatpush.msra.mxu0 0.0
      %114 = vmatpush.msra.mxu0 0.0
      %115 = vmatpush.msra.mxu0 0.0
      %116 = vmatpush.msra.mxu0 %v95
      %117 = vmatpush.msra.mxu0 %v94
      %118 = vmatpush.msra.mxu0 %v93
      %119 = vmatpush.msra.mxu0 %v92
      %120 = vmatmul.f32.gmra.mxu0 %v102
      %v121 = vpop.f32.mrf.mxu0
      %v122 = vadd.f32 %v98, %v121
      %123 = vdwg.mxu0
      %124 = vst [vmem:[#allocation8] sm:$0x3] %v122
    $region29: #{tpu_custom_call.1} parent=1 // pred_fallthru
      _
    // Predicated region
    $region30: #{tpu_custom_call.1} parent=1 // pred_check
      _
    $region31: #{tpu_custom_call.1} parent=1 // pred_check_branch
      %126 = sbr.rel (0) target = $region33
    $region32: #{tpu_custom_call.1} parent=1 // pred_region
      %128 = vsyncadd [#allocation5], 0
      %s130 = sshll.u32 [#allocation8], 4
      %s131 = int_to_ptr.vmem [resolvable:$true] %s130
      %s132 = sshll.u32 %s3, 4
      %s133 = int_to_ptr.hbm [resolvable:$true] %s132
      %135 = dma.vmem_to_hbm [thread:$0]  %s131, 32, %s133, [#allocation5]
    $region33: #{tpu_custom_call.1} parent=1 // pred_fallthru
      _
    // Predicated region
    $region34: #{tpu_custom_call.1} parent=1 // pred_check
      _
    $region35: #{tpu_custom_call.1} parent=1 // pred_check_branch
      %137 = sbr.rel (0) target = $region37
    $region36: #{tpu_custom_call.1} parent=1 // pred_region
      %139 = dma.done [#allocation5], 32
    $region37: #{tpu_custom_call.1} parent=1 // pred_fallthru
      _
    %140 = vsyncpa [#allocation4], 1
    %141 = vsyncpa [#allocation7], 1
    %142 = vsyncpa [#allocation5], 1

</llo_original>
